<compile_context>
chip_gen: v7x
topology: tpu7x:2x2x1
jax: 0.10.0
libtpu: 0.0.40
codegen_flags: <defaults>
</compile_context>

<pallas_src>
import functools

import jax
import jax.numpy as jnp
from jax.experimental import pallas as pl
from jax.experimental.pallas import tpu as pltpu

LANE = 128
SUBLANE = 8
MAX_TILE_ROWS = 1024   # 1024x128 f32 tile = 512 KiB; double-buffered = 1 MiB (fits all gens)
NCORES = 2             # parallel leading grid axis (v7x megacore); no-op cost on 1-TC chips


def _round_up(x, m):
    return ((x + m - 1) // m) * m


def _neg_log_sum_kernel(x_ref, acc_ref, *, one_minus, chunks):
    """Accumulate per-(sublane, lane) partial sums of -clamp(log(x or 1-x), -100)."""
    i = pl.program_id(1)

    @pl.when(i == 0)
    def _():
        acc_ref[...] = jnp.zeros_like(acc_ref)

    x = x_ref[...].astype(jnp.float32)
    if one_minus:
        x = 1.0 - x
    neg_log = -jnp.maximum(jnp.log(x), -100.0)
    # (tile_rows, LANE) -> (chunks, SUBLANE, LANE) -> (SUBLANE, LANE): tile-aligned
    # reshape + pure VPU adds; no per-step cross-lane XLU reduce.
    acc_ref[...] += neg_log.reshape(chunks, SUBLANE, LANE).sum(axis=0)


def _neg_log_mean(x, *, one_minus):
    """mean(-clamp(log(x), -100)) (one_minus=False) or mean(-clamp(log(1-x), -100))."""
    n = x.size
    pad_val = 0.0 if one_minus else 1.0   # BCE-neutral filler: contributes exactly 0

    flat = x.reshape(-1)                  # keep native dtype in HBM
    rows_min = _round_up(pl.cdiv(n, LANE), SUBLANE)
    tile_rows = min(rows_min, MAX_TILE_ROWS)
    grid_steps = _round_up(rows_min, tile_rows) // tile_rows
    ncores = NCORES if grid_steps >= NCORES else 1
    steps_per_core = pl.cdiv(grid_steps, ncores)
    rows = ncores * steps_per_core * tile_rows

    # Single pad per input, straight to the final slab size (skipped if already exact).
    padded = rows * LANE
    if padded != n:
        flat = jnp.pad(flat, (0, padded - n), constant_values=pad_val)
    slab = flat.reshape(rows, LANE)

    kernel = functools.partial(_neg_log_sum_kernel, one_minus=one_minus,
                               chunks=tile_rows // SUBLANE)

    cost = pl.CostEstimate(
        flops=3 * padded,
        transcendentals=padded,
        bytes_accessed=padded * slab.dtype.itemsize + ncores * SUBLANE * LANE * 4,
    )

    partials = pl.pallas_call(
        kernel,
        out_shape=jax.ShapeDtypeStruct((ncores * SUBLANE, LANE), jnp.float32),
        grid=(ncores, steps_per_core),
        in_specs=[pl.BlockSpec((tile_rows, LANE),
                               lambda c, i: (c * steps_per_core + i, 0))],
        out_specs=pl.BlockSpec((SUBLANE, LANE), lambda c, i: (c, 0)),
        compiler_params=pltpu.CompilerParams(
            dimension_semantics=("parallel", "arbitrary")),
        cost_estimate=cost,
    )(slab)

    # One tiny final cross-lane reduce outside the kernel.
    return jnp.sum(partials) / n


@jax.jit
def dre_loss(preds_real, preds_fake):
    loss_real = _neg_log_mean(preds_real, one_minus=False)   # BCE vs targets of 1
    loss_fake = _neg_log_mean(preds_fake, one_minus=True)    # BCE vs targets of 0
    return loss_real + loss_fake


if __name__ == "__main__":
    key = jax.random.PRNGKey(0)
    k1, k2 = jax.random.split(key)

    # Discriminator outputs (post-sigmoid probabilities), NCHW layout.
    B, C, H, W = 2, 4, 16, 16
    preds_real = jax.nn.sigmoid(jax.random.normal(k1, (B, C, H, W), jnp.float32))
    preds_fake = jax.nn.sigmoid(jax.random.normal(k2, (B, C, H, W), jnp.float32))

    loss = dre_loss(preds_real, preds_fake)
    jax.block_until_ready(loss)

    # Pure-JAX reference for sanity.
    ref_real = jnp.mean(-jnp.maximum(jnp.log(preds_real), -100.0))
    ref_fake = jnp.mean(-jnp.maximum(jnp.log(1.0 - preds_fake), -100.0))
    ref = ref_real + ref_fake
    assert jnp.allclose(loss, ref, rtol=1e-5, atol=1e-5), (loss, ref)

    print("KERNEL_OK")
</pallas_src>

<mosaic_0001>
module attributes {stable_mosaic.version = 11 : i64} {
  func.func @_neg_log_sum_kernel(%arg0: i32, %arg1: i32, %arg2: memref<16x128xf32, #tpu.memory_space<vmem>>, %arg3: memref<8x128xf32, #tpu.memory_space<vmem>>) attributes {dimension_semantics = [#tpu.dimension_semantics<parallel>, #tpu.dimension_semantics<arbitrary>], iteration_bounds = array<i64: 1, 1>, scalar_prefetch = 0 : i64, scratch_operands = 0 : i64, tpu.core_type = #tpu.core_type<tc>, window_params = [{transform_indices = @transform_0, window_bounds = array<i64: 16, 128>}, {transform_indices = @transform_1, window_bounds = array<i64: 8, 128>}]} {
    %c0_i32 = arith.constant 0 : i32
    %0 = arith.cmpi eq, %arg1, %c0_i32 : i32
    %1 = arith.extui %0 : i1 to i32
    %c0_i32_0 = arith.constant 0 : i32
    %2 = arith.cmpi ne, %1, %c0_i32_0 : i32
    scf.if %2 {
      %cst_8 = arith.constant 0.000000e+00 : f32
      %14 = vector.broadcast %cst_8 : f32 to vector<8x128xf32>
      %c0_9 = arith.constant 0 : index
      %c0_10 = arith.constant 0 : index
      %15 = vector.load %arg3[%c0_9, %c0_10] : memref<8x128xf32, #tpu.memory_space<vmem>>, vector<8x128xf32>
      tpu.vector_store %arg3[%c0_9, %c0_10], %14 {strides = array<i32>} : memref<8x128xf32, #tpu.memory_space<vmem>>, vector<8x128xf32>,
    } else {
    }
    %c0 = arith.constant 0 : index
    %c0_1 = arith.constant 0 : index
    %3 = vector.load %arg2[%c0, %c0_1] : memref<16x128xf32, #tpu.memory_space<vmem>>, vector<16x128xf32>
    %4 = math.log %3 : vector<16x128xf32>
    %cst = arith.constant -1.000000e+02 : f32
    %5 = vector.broadcast %cst : f32 to vector<16x128xf32>
    %6 = arith.maximumf %4, %5 : vector<16x128xf32>
    %cst_2 = arith.constant 0.000000e+00 : f32
    %7 = vector.broadcast %cst_2 : f32 to vector<16x128xf32>
    %8 = arith.subf %7, %6 : vector<16x128xf32>
    %c0_3 = arith.constant 0 : index
    %c0_4 = arith.constant 0 : index
    %9 = vector.load %arg3[%c0_3, %c0_4] : memref<8x128xf32, #tpu.memory_space<vmem>>, vector<8x128xf32>
    %10 = vector.shape_cast %8 : vector<16x128xf32> to vector<2x8x128xf32>
    %cst_5 = arith.constant dense<0.000000e+00> : vector<8x128xf32>
    %11 = vector.multi_reduction <add>, %10, %cst_5 [0] : vector<2x8x128xf32> to vector<8x128xf32>
    %12 = arith.addf %9, %11 : vector<8x128xf32>
    %c0_6 = arith.constant 0 : index
    %c0_7 = arith.constant 0 : index
    %13 = vector.load %arg3[%c0_6, %c0_7] : memref<8x128xf32, #tpu.memory_space<vmem>>, vector<8x128xf32>
    tpu.vector_store %arg3[%c0_6, %c0_7], %12 {strides = array<i32>} : memref<8x128xf32, #tpu.memory_space<vmem>>, vector<8x128xf32>,
    return
  }
  func.func @transform_0(%arg0: i32, %arg1: i32) -> (i32, i32) {
    %c1_i32 = arith.constant 1 : i32
    %0 = arith.muli %arg0, %c1_i32 : i32
    %1 = arith.addi %0, %arg1 : i32
    %c0_i32 = arith.constant 0 : i32
    %c0_i32_0 = arith.constant 0 : i32
    return %1, %c0_i32 : i32, i32
  }
  func.func @transform_1(%arg0: i32, %arg1: i32) -> (i32, i32) {
    %c0_i32 = arith.constant 0 : i32
    %c0_i32_0 = arith.constant 0 : i32
    return %arg0, %c0_i32 : i32, i32
  }
}

module attributes {stable_mosaic.version = 11 : i64} {
  func.func @_neg_log_sum_kernel(%arg0: i32, %arg1: i32, %arg2: memref<16x128xf32, #tpu.memory_space<vmem>>, %arg3: memref<8x128xf32, #tpu.memory_space<vmem>>) attributes {dimension_semantics = [#tpu.dimension_semantics<parallel>, #tpu.dimension_semantics<arbitrary>], iteration_bounds = array<i64: 1, 1>, scalar_prefetch = 0 : i64, scratch_operands = 0 : i64, tpu.core_type = #tpu.core_type<tc>, window_params = [{transform_indices = @transform_0, window_bounds = array<i64: 16, 128>}, {transform_indices = @transform_1, window_bounds = array<i64: 8, 128>}]} {
    %c0_i32 = arith.constant 0 : i32
    %0 = arith.cmpi eq, %arg1, %c0_i32 : i32
    %1 = arith.extui %0 : i1 to i32
    %c0_i32_0 = arith.constant 0 : i32
    %2 = arith.cmpi ne, %1, %c0_i32_0 : i32
    scf.if %2 {
      %cst_9 = arith.constant 0.000000e+00 : f32
      %16 = vector.broadcast %cst_9 : f32 to vector<8x128xf32>
      %c0_10 = arith.constant 0 : index
      %c0_11 = arith.constant 0 : index
      %17 = vector.load %arg3[%c0_10, %c0_11] : memref<8x128xf32, #tpu.memory_space<vmem>>, vector<8x128xf32>
      tpu.vector_store %arg3[%c0_10, %c0_11], %16 {strides = array<i32>} : memref<8x128xf32, #tpu.memory_space<vmem>>, vector<8x128xf32>,
    } else {
    }
    %c0 = arith.constant 0 : index
    %c0_1 = arith.constant 0 : index
    %3 = vector.load %arg2[%c0, %c0_1] : memref<16x128xf32, #tpu.memory_space<vmem>>, vector<16x128xf32>
    %cst = arith.constant 1.000000e+00 : f32
    %4 = vector.broadcast %cst : f32 to vector<16x128xf32>
    %5 = arith.subf %4, %3 : vector<16x128xf32>
    %6 = math.log %5 : vector<16x128xf32>
    %cst_2 = arith.constant -1.000000e+02 : f32
    %7 = vector.broadcast %cst_2 : f32 to vector<16x128xf32>
    %8 = arith.maximumf %6, %7 : vector<16x128xf32>
    %cst_3 = arith.constant 0.000000e+00 : f32
    %9 = vector.broadcast %cst_3 : f32 to vector<16x128xf32>
    %10 = arith.subf %9, %8 : vector<16x128xf32>
    %c0_4 = arith.constant 0 : index
    %c0_5 = arith.constant 0 : index
    %11 = vector.load %arg3[%c0_4, %c0_5] : memref<8x128xf32, #tpu.memory_space<vmem>>, vector<8x128xf32>
    %12 = vector.shape_cast %10 : vector<16x128xf32> to vector<2x8x128xf32>
    %cst_6 = arith.constant dense<0.000000e+00> : vector<8x128xf32>
    %13 = vector.multi_reduction <add>, %12, %cst_6 [0] : vector<2x8x128xf32> to vector<8x128xf32>
    %14 = arith.addf %11, %13 : vector<8x128xf32>
    %c0_7 = arith.constant 0 : index
    %c0_8 = arith.constant 0 : index
    %15 = vector.load %arg3[%c0_7, %c0_8] : memref<8x128xf32, #tpu.memory_space<vmem>>, vector<8x128xf32>
    tpu.vector_store %arg3[%c0_7, %c0_8], %14 {strides = array<i32>} : memref<8x128xf32, #tpu.memory_space<vmem>>, vector<8x128xf32>,
    return
  }
  func.func @transform_0(%arg0: i32, %arg1: i32) -> (i32, i32) {
    %c1_i32 = arith.constant 1 : i32
    %0 = arith.muli %arg0, %c1_i32 : i32
    %1 = arith.addi %0, %arg1 : i32
    %c0_i32 = arith.constant 0 : i32
    %c0_i32_0 = arith.constant 0 : i32
    return %1, %c0_i32 : i32, i32
  }
  func.func @transform_1(%arg0: i32, %arg1: i32) -> (i32, i32) {
    %c0_i32 = arith.constant 0 : i32
    %c0_i32_0 = arith.constant 0 : i32
    return %arg0, %c0_i32 : i32, i32
  }
}

</mosaic_0001>

<llo_original>
// kernel: dre_loss.2
$region0: #{dre_loss.2}
  #allocation0 [shape = 'u32[]', space=smem, size = 0x4, offset = 0x4, fixed_abs, tag = 'smem constant byte address 0x4 - core index']
  #allocation1 [shape = 'u32[144,128]{1,0:T(1,128)}', space=vmem, size = 0x12000, scoped, tag = 'internal scratch']
  %s0 = inlined_call_operand.vmem [shape: f32[16,128], index: 0, kind: input, shape index: {}]
  %s1 = inlined_call_operand.vmem [shape: f32[8,128], index: 1, kind: output, shape index: {}]
  %s2 = sld [smem:[#allocation0]]
  $region18: #{dre_loss.2} parent=0
    _
  %s4 = ssub.s32 1, %s2
  %s5 = scalar_select 0, %s4, %s2
  // Predicated region
  $region2: #{dre_loss.2} parent=0 // pred_check
    _
  $region3: #{dre_loss.2} parent=0 // pred_check_branch
    %7 = sbr.rel (0) target = $region5
  $region4: #{dre_loss.2} parent=0 // pred_region
    %s8 = sadd.s32 0, 0
    %s9 = smul.u32 2, %s8
    %p10 = scmp.lt.s32.totalorder %s9, 1
    %s11 = scalar_select %p10, %s9, 1
    %s12 = smul.addr %s11, 8
    %s13 = scalar_lea.vmem %s0, %s12
    %s14 = sadd.s32 0, 0
    %s15 = smul.u32 2, %s14
  $region5: #{dre_loss.2} parent=0 // pred_fallthru
    _
  %s16 = sadd.s32 0, 0
  %s17 = smul.u32 2, %s16
  %p18 = scmp.lt.s32.totalorder %s17, 1
  %s19 = scalar_select %p18, %s17, 1
  %s20 = smul.addr %s19, 8
  %s21 = scalar_lea.vmem %s0, %s20
  %s22 = sadd.s32 0, 0
  %s23 = smul.u32 2, %s22
  %p24 = scmp.lt.s32.totalorder %s23, 1
  %s25 = scalar_select %p24, %s23, 1
  %s26 = smul.addr %s25, 8
  %s27 = scalar_lea.vmem %s0, %s26
  %s28 = sadd.s32 0, 0
  %s29 = smul.u32 2, %s28
  %p30 = scmp.eq.s32.totalorder 0, 0
  // Predicated region
  $region6: #{dre_loss.2} parent=0 // pred_check
    %p31 = pneg %p30
  $region7: #{dre_loss.2} parent=0 // pred_check_branch
    %33 = sbr.rel (%p31) target = $region9
  $region8: #{dre_loss.2} parent=0 // pred_region
    %34 = vst [vmem:[%s1] sm:$0xff] 0.0
  $region9: #{dre_loss.2} parent=0 // pred_fallthru
    _
  %v35 = vld [vmem:[%s27] sm:$0xff]
  %v36 = vld [vmem:[%s27 + $0x8] sm:$0xff]
  %v37 = vlog2.pop %v35
  %v38 = vmul.f32 %v37, 0.6931472
  %v39 = vlog2.pop %v36
  %v40 = vmul.f32 %v39, 0.6931472
  %v41 = vmax.f32 %v38, -100.0
  %v42 = vmax.f32 %v40, -100.0
  %v43 = vsub.f32 0.0, %v41
  %v44 = vsub.f32 0.0, %v42
  %v45 = vld [vmem:[%s1] sm:$0xff]
  %v46 = vadd.f32 %v43, %v44
  %v47 = vadd.f32 %v45, %v46
  %48 = vst [vmem:[%s1] sm:$0xff] %v47
  // Predicated region
  $region10: #{dre_loss.2} parent=0 // pred_check
    _
  $region11: #{dre_loss.2} parent=0 // pred_check_branch
    %50 = sbr.rel (0) target = $region13
  $region12: #{dre_loss.2} parent=0 // pred_region
    _
  $region13: #{dre_loss.2} parent=0 // pred_fallthru
    _
  // Predicated region
  $region14: #{dre_loss.2} parent=0 // pred_check
    _
  $region15: #{dre_loss.2} parent=0 // pred_check_branch
    %52 = sbr.rel (0) target = $region17
  $region16: #{dre_loss.2} parent=0 // pred_region
    _
  $region17: #{dre_loss.2} parent=0 // pred_fallthru
    _

// kernel: dre_loss.3
$region0: #{dre_loss.3}
  #allocation0 [shape = 'u32[]', space=smem, size = 0x4, offset = 0x4, fixed_abs, tag = 'smem constant byte address 0x4 - core index']
  #allocation1 [shape = 'u32[144,128]{1,0:T(1,128)}', space=vmem, size = 0x12000, scoped, tag = 'internal scratch']
  %s0 = inlined_call_operand.vmem [shape: f32[16,128], index: 0, kind: input, shape index: {}]
  %s1 = inlined_call_operand.vmem [shape: f32[8,128], index: 1, kind: output, shape index: {}]
  %s2 = sld [smem:[#allocation0]]
  $region18: #{dre_loss.3} parent=0
    _
  %s4 = ssub.s32 1, %s2
  %s5 = scalar_select 0, %s4, %s2
  // Predicated region
  $region2: #{dre_loss.3} parent=0 // pred_check
    _
  $region3: #{dre_loss.3} parent=0 // pred_check_branch
    %7 = sbr.rel (0) target = $region5
  $region4: #{dre_loss.3} parent=0 // pred_region
    %s8 = sadd.s32 0, 0
    %s9 = smul.u32 2, %s8
    %p10 = scmp.lt.s32.totalorder %s9, 1
    %s11 = scalar_select %p10, %s9, 1
    %s12 = smul.addr %s11, 8
    %s13 = scalar_lea.vmem %s0, %s12
    %s14 = sadd.s32 0, 0
    %s15 = smul.u32 2, %s14
  $region5: #{dre_loss.3} parent=0 // pred_fallthru
    _
  %s16 = sadd.s32 0, 0
  %s17 = smul.u32 2, %s16
  %p18 = scmp.lt.s32.totalorder %s17, 1
  %s19 = scalar_select %p18, %s17, 1
  %s20 = smul.addr %s19, 8
  %s21 = scalar_lea.vmem %s0, %s20
  %s22 = sadd.s32 0, 0
  %s23 = smul.u32 2, %s22
  %p24 = scmp.lt.s32.totalorder %s23, 1
  %s25 = scalar_select %p24, %s23, 1
  %s26 = smul.addr %s25, 8
  %s27 = scalar_lea.vmem %s0, %s26
  %s28 = sadd.s32 0, 0
  %s29 = smul.u32 2, %s28
  %p30 = scmp.eq.s32.totalorder 0, 0
  // Predicated region
  $region6: #{dre_loss.3} parent=0 // pred_check
    %p31 = pneg %p30
  $region7: #{dre_loss.3} parent=0 // pred_check_branch
    %33 = sbr.rel (%p31) target = $region9
  $region8: #{dre_loss.3} parent=0 // pred_region
    %34 = vst [vmem:[%s1] sm:$0xff] 0.0
  $region9: #{dre_loss.3} parent=0 // pred_fallthru
    _
  %v35 = vld [vmem:[%s27] sm:$0xff]
  %v36 = vld [vmem:[%s27 + $0x8] sm:$0xff]
  %v37 = vsub.f32 1.0, %v35
  %v38 = vsub.f32 1.0, %v36
  %v39 = vlog2.pop %v37
  %v40 = vmul.f32 %v39, 0.6931472
  %v41 = vlog2.pop %v38
  %v42 = vmul.f32 %v41, 0.6931472
  %v43 = vmax.f32 %v40, -100.0
  %v44 = vmax.f32 %v42, -100.0
  %v45 = vsub.f32 0.0, %v43
  %v46 = vsub.f32 0.0, %v44
  %v47 = vld [vmem:[%s1] sm:$0xff]
  %v48 = vadd.f32 %v45, %v46
  %v49 = vadd.f32 %v47, %v48
  %50 = vst [vmem:[%s1] sm:$0xff] %v49
  // Predicated region
  $region10: #{dre_loss.3} parent=0 // pred_check
    _
  $region11: #{dre_loss.3} parent=0 // pred_check_branch
    %52 = sbr.rel (0) target = $region13
  $region12: #{dre_loss.3} parent=0 // pred_region
    _
  $region13: #{dre_loss.3} parent=0 // pred_fallthru
    _
  // Predicated region
  $region14: #{dre_loss.3} parent=0 // pred_check
    _
  $region15: #{dre_loss.3} parent=0 // pred_check_branch
    %54 = sbr.rel (0) target = $region17
  $region16: #{dre_loss.3} parent=0 // pred_region
    _
  $region17: #{dre_loss.3} parent=0 // pred_fallthru
    _

</llo_original>
